<compile_context>
chip_gen: v5e
topology: v5e:2x2
jax: 0.10.0
libtpu: 0.0.40
codegen_flags: <defaults>
</compile_context>

<pallas_src>
import numpy as np
import jax
import jax.numpy as jnp
from jax.experimental import pallas as pl
from jax.experimental.pallas import tpu as pltpu


def _bilinear_matrix(out_size: int, in_size: int) -> np.ndarray:
    """Row-interpolation matrix M (out_size, in_size): resized = M @ x."""
    M = np.zeros((out_size, in_size), dtype=np.float32)
    if out_size == in_size:
        np.fill_diagonal(M, 1.0)
        return M
    scale = in_size / out_size
    for i in range(out_size):
        src = (i + 0.5) * scale - 0.5
        src = max(src, 0.0)
        i0 = int(np.floor(src))
        frac = src - i0
        i0c = min(max(i0, 0), in_size - 1)
        i1c = min(i0 + 1, in_size - 1)
        M[i, i0c] += 1.0 - frac
        M[i, i1c] += frac
    return M


def _geometry(H: int, W: int, T: int):
    """Reproduce the PIL (w, h) branch logic of the PyTorch module exactly."""
    if W > H:
        new_h = int(np.round(T * (H / W)))
        new_w = T
        total_pad = T - new_h
        pad_top, pad_left = total_pad // 2, 0
    else:
        new_h = T
        new_w = int(np.round(T * (W / H)))
        total_pad = T - new_w
        pad_top, pad_left = 0, total_pad // 2
    return new_h, new_w, pad_top, pad_left


def _pick_row_tile(T: int, C: int, bytes_budget: int = 8 << 20) -> int:
    """Output row-tile height: prefer 256-512 rows (near HBM roofline), keep
    >= 2 tiles when T allows (so the leading grid axis can split across v7x's
    two TensorCores) and keep the double-buffered f32 output block bounded."""
    for tq in (512, 448, 384, 320, 256, 192, 128, 64, 32, 16, 8):
        if T % tq == 0 and tq < T and 2 * C * tq * T * 4 <= bytes_budget:
            return tq
    return T


def resize_square_pad(x: jax.Array, target_length: int, pad_value: float = 0.0) -> jax.Array:
    """x: (C, H, W) -> (C, T, T) float32, T = target_length."""
    C, H, W = map(int, x.shape)
    T = int(target_length)
    new_h, new_w, pad_top, pad_left = _geometry(H, W, T)

    # Pad-folded interpolation matrices: zero rows/columns produce zeros in
    # the pad border, so a single matmul pair yields the full (T, T) output.
    rh_pad = np.zeros((T, H), np.float32)
    rh_pad[pad_top:pad_top + new_h, :] = _bilinear_matrix(new_h, H)
    rwt_pad = np.zeros((W, T), np.float32)
    rwt_pad[:, pad_left:pad_left + new_w] = _bilinear_matrix(new_w, W).T

    add_bias = float(pad_value) != 0.0
    if add_bias:
        bias_np = np.full((T, T), float(pad_value), np.float32)
        bias_np[pad_top:pad_top + new_h, pad_left:pad_left + new_w] = 0.0

    TQ = _pick_row_tile(T, C)
    n_tiles = T // TQ

    # Free wrapper-side decision: pick the cheaper matmul order.  The
    # columns-first order recomputes img @ RwT per row tile, so fold n_tiles
    # into its cost.
    cost_rows_first = T * W * (H + T)
    cost_cols_first = n_tiles * H * W * T + T * H * T
    cols_first = cost_cols_first < cost_rows_first

    # bf16 MXU operands, f32 accumulation.
    x_bf = x.astype(jnp.bfloat16)
    rh_bf = jnp.asarray(rh_pad, dtype=jnp.bfloat16)
    rwt_bf = jnp.asarray(rwt_pad, dtype=jnp.bfloat16)

    def kernel(*refs):
        if add_bias:
            x_ref, rh_ref, rwt_ref, bias_ref, o_ref = refs
        else:
            x_ref, rh_ref, rwt_ref, o_ref = refs
        rh = rh_ref[...]                                   # (TQ, H) bf16
        rwt = rwt_ref[...]                                 # (W,  T) bf16
        bias = bias_ref[...] if add_bias else None         # (TQ, T) f32
        # Static unrolled channel loop: Rh/RwT stay resident, C is tiny.
        for c in range(C):
            img = x_ref[c]                                 # (H, W) bf16
            if cols_first:
                t0 = jnp.dot(img, rwt, preferred_element_type=jnp.float32)       # (H, T)
                res = jnp.dot(rh, t0.astype(jnp.bfloat16),
                              preferred_element_type=jnp.float32)                # (TQ, T)
            else:
                t0 = jnp.dot(rh, img, preferred_element_type=jnp.float32)        # (TQ, W)
                res = jnp.dot(t0.astype(jnp.bfloat16), rwt,
                              preferred_element_type=jnp.float32)                # (TQ, T)
            if add_bias:
                res = res + bias
            o_ref[c] = res.astype(o_ref.dtype)

    in_specs = [
        pl.BlockSpec((C, H, W), lambda i: (0, 0, 0)),      # whole image, kept resident
        pl.BlockSpec((TQ, H), lambda i: (i, 0)),           # row tile of Rh_pad
        pl.BlockSpec((W, T), lambda i: (0, 0)),
    ]
    args = [x_bf, rh_bf, rwt_bf]
    if add_bias:
        in_specs.append(pl.BlockSpec((TQ, T), lambda i: (i, 0)))
        args.append(jnp.asarray(bias_np))

    out = pl.pallas_call(
        kernel,
        out_shape=jax.ShapeDtypeStruct((C, T, T), jnp.float32),
        grid_spec=pltpu.PrefetchScalarGridSpec(
            num_scalar_prefetch=0,
            grid=(n_tiles,),
            in_specs=in_specs,
            out_specs=pl.BlockSpec((C, TQ, T), lambda i: (0, i, 0)),
        ),
        compiler_params=pltpu.CompilerParams(dimension_semantics=("parallel",)),
    )(*args)
    return out


def _reference(x, target_length, pad_value=0.0):
    """Pure-JAX f32 reference with the same math (for verification)."""
    C, H, W = map(int, x.shape)
    T = int(target_length)
    new_h, new_w, pad_top, pad_left = _geometry(H, W, T)
    rh = jnp.asarray(_bilinear_matrix(new_h, H))
    rw = jnp.asarray(_bilinear_matrix(new_w, W))
    resized = jnp.einsum("oh,chw,pw->cop", rh, x.astype(jnp.float32), rw)
    out = jnp.full((C, T, T), float(pad_value), jnp.float32)
    out = out.at[:, pad_top:pad_top + new_h, pad_left:pad_left + new_w].set(resized)
    return out


if __name__ == "__main__":
    key = jax.random.PRNGKey(0)
    TARGET = 16
    k1, k2 = jax.random.split(key)

    # Landscape (w > h branch): pad on top/bottom, pad_value = 0.
    x_land = jax.random.uniform(k1, (3, 12, 16), dtype=jnp.float32)
    out_land = jax.block_until_ready(resize_square_pad(x_land, TARGET, pad_value=0.0))
    ref_land = _reference(x_land, TARGET, pad_value=0.0)
    assert out_land.shape == (3, TARGET, TARGET), out_land.shape
    np.testing.assert_allclose(np.asarray(out_land), np.asarray(ref_land),
                               rtol=2e-2, atol=2e-2)

    # Portrait (w <= h branch): pad on left/right, non-zero pad_value.
    x_port = jax.random.uniform(k2, (3, 16, 12), dtype=jnp.float32)
    out_port = jax.block_until_ready(resize_square_pad(x_port, TARGET, pad_value=0.5))
    ref_port = _reference(x_port, TARGET, pad_value=0.5)
    assert out_port.shape == (3, TARGET, TARGET), out_port.shape
    np.testing.assert_allclose(np.asarray(out_port), np.asarray(ref_port),
                               rtol=2e-2, atol=2e-2)

    print("KERNEL_OK")
</pallas_src>

<mosaic_0001>
module attributes {stable_mosaic.version = 11 : i64} {
  func.func @kernel(%arg0: i32, %arg1: memref<3x12x16xbf16, #tpu.memory_space<vmem>>, %arg2: memref<8x12xbf16, #tpu.memory_space<vmem>>, %arg3: memref<16x16xbf16, #tpu.memory_space<vmem>>, %arg4: memref<3x8x16xf32, #tpu.memory_space<vmem>>) attributes {dimension_semantics = [#tpu.dimension_semantics<parallel>], iteration_bounds = array<i64: 2>, scalar_prefetch = 0 : i64, scratch_operands = 0 : i64, tpu.core_type = #tpu.core_type<tc>, window_params = [{pipeline_mode = #tpu.pipeline_mode<synchronous>, transform_indices = @transform_0, window_bounds = array<i64: 3, 12, 16>}, {transform_indices = @transform_1, window_bounds = array<i64: 8, 12>}, {pipeline_mode = #tpu.pipeline_mode<synchronous>, transform_indices = @transform_2, window_bounds = array<i64: 16, 16>}, {transform_indices = @transform_3, window_bounds = array<i64: 3, 8, 16>}]} {
    %c0 = arith.constant 0 : index
    %c0_0 = arith.constant 0 : index
    %0 = vector.load %arg2[%c0, %c0_0] : memref<8x12xbf16, #tpu.memory_space<vmem>>, vector<8x12xbf16>
    %c0_1 = arith.constant 0 : index
    %c0_2 = arith.constant 0 : index
    %1 = vector.load %arg3[%c0_1, %c0_2] : memref<16x16xbf16, #tpu.memory_space<vmem>>, vector<16x16xbf16>
    %c0_3 = arith.constant 0 : index
    %c0_4 = arith.constant 0 : index
    %c0_5 = arith.constant 0 : index
    %2 = vector.load %arg1[%c0_3, %c0_4, %c0_5] : memref<3x12x16xbf16, #tpu.memory_space<vmem>>, vector<1x12x16xbf16>
    %3 = vector.shape_cast %2 : vector<1x12x16xbf16> to vector<12x16xbf16>
    %cst = arith.constant dense<0.000000e+00> : vector<8x16xf32>
    %4 = tpu.matmul %0, %3, %cst {dimension_numbers = #tpu.dot_dimension_numbers<[1], [0], [0], [1], [0, 0, 1, 1], [], []>} : vector<8x12xbf16>, vector<12x16xbf16>, vector<8x16xf32> -> vector<8x16xf32>
    %5 = arith.truncf %4 : vector<8x16xf32> to vector<8x16xbf16>
    %cst_6 = arith.constant dense<0.000000e+00> : vector<8x16xf32>
    %6 = tpu.matmul %5, %1, %cst_6 {dimension_numbers = #tpu.dot_dimension_numbers<[1], [0], [0], [1], [0, 0, 1, 1], [], []>} : vector<8x16xbf16>, vector<16x16xbf16>, vector<8x16xf32> -> vector<8x16xf32>
    %c0_7 = arith.constant 0 : index
    %c0_8 = arith.constant 0 : index
    %c0_9 = arith.constant 0 : index
    %7 = vector.load %arg4[%c0_7, %c0_8, %c0_9] : memref<3x8x16xf32, #tpu.memory_space<vmem>>, vector<1x8x16xf32>
    %8 = vector.shape_cast %7 : vector<1x8x16xf32> to vector<8x16xf32>
    %9 = vector.shape_cast %6 : vector<8x16xf32> to vector<1x8x16xf32>
    tpu.vector_store %arg4[%c0_7, %c0_8, %c0_9], %9 {strides = array<i32>} : memref<3x8x16xf32, #tpu.memory_space<vmem>>, vector<1x8x16xf32>,
    %c1 = arith.constant 1 : index
    %c0_10 = arith.constant 0 : index
    %c0_11 = arith.constant 0 : index
    %10 = vector.load %arg1[%c1, %c0_10, %c0_11] : memref<3x12x16xbf16, #tpu.memory_space<vmem>>, vector<1x12x16xbf16>
    %11 = vector.shape_cast %10 : vector<1x12x16xbf16> to vector<12x16xbf16>
    %cst_12 = arith.constant dense<0.000000e+00> : vector<8x16xf32>
    %12 = tpu.matmul %0, %11, %cst_12 {dimension_numbers = #tpu.dot_dimension_numbers<[1], [0], [0], [1], [0, 0, 1, 1], [], []>} : vector<8x12xbf16>, vector<12x16xbf16>, vector<8x16xf32> -> vector<8x16xf32>
    %13 = arith.truncf %12 : vector<8x16xf32> to vector<8x16xbf16>
    %cst_13 = arith.constant dense<0.000000e+00> : vector<8x16xf32>
    %14 = tpu.matmul %13, %1, %cst_13 {dimension_numbers = #tpu.dot_dimension_numbers<[1], [0], [0], [1], [0, 0, 1, 1], [], []>} : vector<8x16xbf16>, vector<16x16xbf16>, vector<8x16xf32> -> vector<8x16xf32>
    %c1_14 = arith.constant 1 : index
    %c0_15 = arith.constant 0 : index
    %c0_16 = arith.constant 0 : index
    %15 = vector.load %arg4[%c1_14, %c0_15, %c0_16] : memref<3x8x16xf32, #tpu.memory_space<vmem>>, vector<1x8x16xf32>
    %16 = vector.shape_cast %15 : vector<1x8x16xf32> to vector<8x16xf32>
    %17 = vector.shape_cast %14 : vector<8x16xf32> to vector<1x8x16xf32>
    tpu.vector_store %arg4[%c1_14, %c0_15, %c0_16], %17 {strides = array<i32>} : memref<3x8x16xf32, #tpu.memory_space<vmem>>, vector<1x8x16xf32>,
    %c2 = arith.constant 2 : index
    %c0_17 = arith.constant 0 : index
    %c0_18 = arith.constant 0 : index
    %18 = vector.load %arg1[%c2, %c0_17, %c0_18] : memref<3x12x16xbf16, #tpu.memory_space<vmem>>, vector<1x12x16xbf16>
    %19 = vector.shape_cast %18 : vector<1x12x16xbf16> to vector<12x16xbf16>
    %cst_19 = arith.constant dense<0.000000e+00> : vector<8x16xf32>
    %20 = tpu.matmul %0, %19, %cst_19 {dimension_numbers = #tpu.dot_dimension_numbers<[1], [0], [0], [1], [0, 0, 1, 1], [], []>} : vector<8x12xbf16>, vector<12x16xbf16>, vector<8x16xf32> -> vector<8x16xf32>
    %21 = arith.truncf %20 : vector<8x16xf32> to vector<8x16xbf16>
    %cst_20 = arith.constant dense<0.000000e+00> : vector<8x16xf32>
    %22 = tpu.matmul %21, %1, %cst_20 {dimension_numbers = #tpu.dot_dimension_numbers<[1], [0], [0], [1], [0, 0, 1, 1], [], []>} : vector<8x16xbf16>, vector<16x16xbf16>, vector<8x16xf32> -> vector<8x16xf32>
    %c2_21 = arith.constant 2 : index
    %c0_22 = arith.constant 0 : index
    %c0_23 = arith.constant 0 : index
    %23 = vector.load %arg4[%c2_21, %c0_22, %c0_23] : memref<3x8x16xf32, #tpu.memory_space<vmem>>, vector<1x8x16xf32>
    %24 = vector.shape_cast %23 : vector<1x8x16xf32> to vector<8x16xf32>
    %25 = vector.shape_cast %22 : vector<8x16xf32> to vector<1x8x16xf32>
    tpu.vector_store %arg4[%c2_21, %c0_22, %c0_23], %25 {strides = array<i32>} : memref<3x8x16xf32, #tpu.memory_space<vmem>>, vector<1x8x16xf32>,
    return
  }
  func.func @transform_0(%arg0: i32) -> (i32, i32, i32) {
    %c0_i32 = arith.constant 0 : i32
    %c0_i32_0 = arith.constant 0 : i32
    %c0_i32_1 = arith.constant 0 : i32
    %c0_i32_2 = arith.constant 0 : i32
    return %c0_i32, %c0_i32_0, %c0_i32_1 : i32, i32, i32
  }
  func.func @transform_1(%arg0: i32) -> (i32, i32) {
    %c0_i32 = arith.constant 0 : i32
    %c0_i32_0 = arith.constant 0 : i32
    return %arg0, %c0_i32 : i32, i32
  }
  func.func @transform_2(%arg0: i32) -> (i32, i32) {
    %c0_i32 = arith.constant 0 : i32
    %c0_i32_0 = arith.constant 0 : i32
    %c0_i32_1 = arith.constant 0 : i32
    return %c0_i32, %c0_i32_0 : i32, i32
  }
  func.func @transform_3(%arg0: i32) -> (i32, i32, i32) {
    %c0_i32 = arith.constant 0 : i32
    %c0_i32_0 = arith.constant 0 : i32
    %c0_i32_1 = arith.constant 0 : i32
    return %c0_i32, %arg0, %c0_i32_0 : i32, i32, i32
  }
}

</mosaic_0001>

<llo_original>
// kernel: tpu_custom_call.1
$region0: #{tpu_custom_call.1}
  #allocation0 [shape = 'u32[]', space=smem, size = 0x4, offset = 0x4, fixed_abs, tag = 'smem constant byte address 0x4 - core index']
  #allocation1 [shape = 'u32[72,128]{1,0:T(1,128)}', space=vmem, size = 0x9000, scoped, tag = 'internal scratch']
  %s0 = inlined_call_operand.hbm [shape: bf16[3,12,16], index: 0, kind: input, shape index: {}]
  %s1 = inlined_call_operand.hbm [shape: bf16[16,12], index: 1, kind: input, shape index: {}]
  %s2 = inlined_call_operand.hbm [shape: bf16[16,16], index: 2, kind: input, shape index: {}]
  %s3 = inlined_call_operand.hbm [shape: f32[3,16,16], index: 3, kind: output, shape index: {}]
  %s4 = sld [smem:[#allocation0]]
  $region57: #{tpu_custom_call.1} parent=0
    _
  %s6 = ssub.s32 1, %s4
  %s7 = scalar_select 0, %s6, %s4
  $region1: #{tpu_custom_call.1} parent=0
    #allocation2 [shape = 'u8[12288]{0}', space=vmem, size = 0x3000, scoped, tag = 'input window, operand 0, single buffered']
    #allocation3 [shape = 's32[2]{0}', space=sflag, size = 0x8, scoped, tag = 'scoped memory for tpu_custom_call.1']
    #allocation4 [shape = 's32[2]{0}', space=sflag, size = 0x8, scoped, tag = 'scoped memory for tpu_custom_call.1']
    #allocation5 [shape = 'u8[4096]{0}', space=vmem, size = 0x1000, scoped, tag = 'input window, operand 1']
    #allocation6 [shape = 's32[2]{0}', space=sflag, size = 0x8, scoped, tag = 'scoped memory for tpu_custom_call.1']
    #allocation7 [shape = 'u8[4096]{0}', space=vmem, size = 0x1000, scoped, tag = 'input window, operand 2, single buffered']
    #allocation8 [shape = 'u8[24576]{0}', space=vmem, size = 0x6000, scoped, tag = 'output window, operand 0']
    %8 = vsyncpa [#allocation3], 0
    %9 = vsyncpa [#allocation6], 0
    %s10 = scalar_lea.sflag [#allocation6], 1
    %11 = vsyncpa %s10, 0
    %12 = vsyncpa [#allocation4], 0
    %s13 = scalar_lea.sflag [#allocation4], 1
    %14 = vsyncpa %s13, 0
    loop: start=0, step=1, limit=4
    $region2: #{tpu_custom_call.1} parent=1 // loop_pre_header
      _
    $region3: #{tpu_custom_call.1} parent=1 // loop_header
      %s16 = sphi 0, %s20
      %p17 = scmp.ge.s32.totalorder %s16, 4
      %s24 = sphi 0, %s24
      %s26 = sphi 0, %s24
      %s27 = sphi 0, %s26
      %s41 = sphi 0, %s27
      %s47 = sphi 0, %s49
      %s50 = sphi 0, %s47
      %s51 = sphi 0, %s50
      %s67 = sphi 0, %s51
      %s71 = sphi 0, %s71
      %s73 = sphi 0, %s71
      %s74 = sphi 0, %s73
      %s88 = sphi 0, %s74
      %s94 = sphi 0, %s96
      %s97 = sphi 0, %s94
      %s98 = sphi 0, %s97
      %s114 = sphi 0, %s98
    $region4: #{tpu_custom_call.1} parent=1 // loop_header_branch
      %19 = sbr.rel (%p17) target = $region8
    $region5: #{tpu_custom_call.1} parent=1 // loop_body
      %s21 = ssub.s32 %s16, 1
      %s22 = ssub.s32 %s16, 2
      %s23 = sadd.s32 %s16, 1
      %s25 = sadd.s32 %s24, 1
      %p28 = scmp.eq.s32.totalorder %s16, 1
      %p29 = scmp.ne.s32.totalorder %s24, %s26
      %p30 = scmp.eq.s32.totalorder %s16, 0
      %p31 = por %p29, %p30
      %p32 = scmp.ne.s32.totalorder %s24, %s26
      %p33 = scmp.eq.s32.totalorder %s21, 1
      %p34 = por %p32, %p33
      %p35 = scmp.ne.s32.totalorder %s26, %s27
      %p36 = scmp.eq.s32.totalorder %s21, 0
      %p37 = por %p35, %p36
      %p38 = scmp.ne.s32.totalorder %s26, %s27
      %p39 = scmp.eq.s32.totalorder %s22, 1
      %p40 = por %p38, %p39
      %p42 = scmp.ne.s32.totalorder %s27, %s41
      %p43 = scmp.eq.s32.totalorder %s22, 0
      %p44 = por %p42, %p43
      %s45 = ssub.s32 %s16, %s23
      %p46 = scmp.eq.s32.totalorder %s45, 0
      %s48 = sadd.s32 %s47, 1
      %s49 = scalar_select %p46, %s47, %s48
      %p52 = pneg %p46
      %p53 = scmp.eq.s32.totalorder %s16, 1
      %p54 = por %p52, %p53
      %p55 = scmp.ne.s32.totalorder %s47, %s50
      %p56 = scmp.eq.s32.totalorder %s16, 0
      %p57 = por %p55, %p56
      %p58 = scmp.ne.s32.totalorder %s47, %s50
      %p59 = scmp.eq.s32.totalorder %s21, 1
      %p60 = por %p58, %p59
      %p61 = scmp.ne.s32.totalorder %s50, %s51
      %p62 = scmp.eq.s32.totalorder %s21, 0
      %p63 = por %p61, %p62
      %p64 = scmp.ne.s32.totalorder %s50, %s51
      %p65 = scmp.eq.s32.totalorder %s22, 1
      %p66 = por %p64, %p65
      %p68 = scmp.ne.s32.totalorder %s51, %s67
      %p69 = scmp.eq.s32.totalorder %s22, 0
      %p70 = por %p68, %p69
      %s72 = sadd.s32 %s71, 1
      %p75 = scmp.eq.s32.totalorder %s16, 1
      %p76 = scmp.ne.s32.totalorder %s71, %s73
      %p77 = scmp.eq.s32.totalorder %s16, 0
      %p78 = por %p76, %p77
      %p79 = scmp.ne.s32.totalorder %s71, %s73
      %p80 = scmp.eq.s32.totalorder %s21, 1
      %p81 = por %p79, %p80
      %p82 = scmp.ne.s32.totalorder %s73, %s74
      %p83 = scmp.eq.s32.totalorder %s21, 0
      %p84 = por %p82, %p83
      %p85 = scmp.ne.s32.totalorder %s73, %s74
      %p86 = scmp.eq.s32.totalorder %s22, 1
      %p87 = por %p85, %p86
      %p89 = scmp.ne.s32.totalorder %s74, %s88
      %p90 = scmp.eq.s32.totalorder %s22, 0
      %p91 = por %p89, %p90
      %s92 = ssub.s32 %s16, %s23
      %p93 = scmp.eq.s32.totalorder %s92, 0
      %s95 = sadd.s32 %s94, 1
      %s96 = scalar_select %p93, %s94, %s95
      %p99 = pneg %p93
      %p100 = scmp.eq.s32.totalorder %s16, 1
      %p101 = por %p99, %p100
      %p102 = scmp.ne.s32.totalorder %s94, %s97
      %p103 = scmp.eq.s32.totalorder %s16, 0
      %p104 = por %p102, %p103
      %p105 = scmp.ne.s32.totalorder %s94, %s97
      %p106 = scmp.eq.s32.totalorder %s21, 1
      %p107 = por %p105, %p106
      %p108 = scmp.ne.s32.totalorder %s97, %s98
      %p109 = scmp.eq.s32.totalorder %s21, 0
      %p110 = por %p108, %p109
      %p111 = scmp.ne.s32.totalorder %s97, %s98
      %p112 = scmp.eq.s32.totalorder %s22, 1
      %p113 = por %p111, %p112
      %p115 = scmp.ne.s32.totalorder %s98, %s114
      %p116 = scmp.eq.s32.totalorder %s22, 0
      %p117 = por %p115, %p116
      %p118 = scmp.le.s32.totalorder 1, %s16
      %p119 = scmp.lt.s32.totalorder %s16, 3
      %p120 = pnand %p118, %p119
      %p121 = pneg %p120
      // Predicated region
      $region9: #{tpu_custom_call.1} parent=5 // pred_check
        _
      $region10: #{tpu_custom_call.1} parent=5 // pred_check_branch
        %123 = sbr.rel (%p120) target = $region12
      $region11: #{tpu_custom_call.1} parent=5 // pred_region
        %s124 = ssub.s32 %s16, 1
        // Predicated region
        $region13: #{tpu_custom_call.1} parent=11 // pred_check
          %p125 = pneg %p37
        $region14: #{tpu_custom_call.1} parent=11 // pred_check_branch
          %127 = sbr.rel (%p125) target = $region16
        $region15: #{tpu_custom_call.1} parent=11 // pred_region
          %129 = vsyncadd [#allocation3], 0
          %s130 = sshll.u32 %s0, 4
          %s131 = int_to_ptr.hbm [resolvable:$true] %s130
          %s132 = sshll.u32 [#allocation2], 4
          %s133 = int_to_ptr.vmem [resolvable:$true] %s132
          %138 = dma.hbm_to_vmem [thread:$0]  %s131, 384, %s133, [#allocation3], 64, 64, 4
        $region16: #{tpu_custom_call.1} parent=11 // pred_fallthru
          _
        // Predicated region
        $region17: #{tpu_custom_call.1} parent=11 // pred_check
          %p139 = pneg %p84
        $region18: #{tpu_custom_call.1} parent=11 // pred_check_branch
          %141 = sbr.rel (%p139) target = $region20
        $region19: #{tpu_custom_call.1} parent=11 // pred_region
          %143 = vsyncadd [#allocation6], 0
          %s144 = sshll.u32 %s2, 4
          %s145 = int_to_ptr.hbm [resolvable:$true] %s144
          %s146 = sshll.u32 [#allocation7], 4
          %s147 = int_to_ptr.vmem [resolvable:$true] %s146
          %152 = dma.hbm_to_vmem [thread:$0]  %s145, 128, %s147, [#allocation6], 64, 64, 4
        $region20: #{tpu_custom_call.1} parent=11 // pred_fallthru
          _
      $region12: #{tpu_custom_call.1} parent=5 // pred_fallthru
        _
      %p153 = scmp.lt.s32.totalorder %s16, 2
      // Predicated region
      $region21: #{tpu_custom_call.1} parent=5 // pred_check
        %p154 = pneg %p153
      $region22: #{tpu_custom_call.1} parent=5 // pred_check_branch
        %156 = sbr.rel (%p154) target = $region24
      $region23: #{tpu_custom_call.1} parent=5 // pred_region
        // Predicated region
        $region25: #{tpu_custom_call.1} parent=23 // pred_check
          %p157 = pneg %p57
        $region26: #{tpu_custom_call.1} parent=23 // pred_check_branch
          %159 = sbr.rel (%p157) target = $region28
        $region27: #{tpu_custom_call.1} parent=23 // pred_region
          %s160 = sand.u32 %s16, 1
          %s161 = scalar_lea.sflag [#allocation6], %s160
          %s162 = sand.u32 %s47, 1
          %s163 = smul.addr %s162, 4
          %s164 = scalar_lea.vmem [#allocation5], %s163
          %166 = vsyncadd %s161, 0
          %s167 = smul.addr %s16, 4
          %s168 = scalar_lea.hbm %s1, %s167
          %s170 = sshll.u32 %s168, 4
          %s171 = int_to_ptr.hbm [resolvable:$true] %s170
          %s172 = sshll.u32 %s164, 4
          %s173 = int_to_ptr.vmem [resolvable:$true] %s172
          %175 = dma.hbm_to_vmem [thread:$0]  %s171, 64, %s173, %s161
        $region28: #{tpu_custom_call.1} parent=23 // pred_fallthru
          _
      $region24: #{tpu_custom_call.1} parent=5 // pred_fallthru
        _
      %p176 = scmp.le.s32.totalorder 1, %s16
      %p177 = scmp.lt.s32.totalorder %s16, 3
      %p178 = pnand %p176, %p177
      %p179 = pneg %p178
      // Predicated region
      $region29: #{tpu_custom_call.1} parent=5 // pred_check
        _
      $region30: #{tpu_custom_call.1} parent=5 // pred_check_branch
        %181 = sbr.rel (%p178) target = $region32
      $region31: #{tpu_custom_call.1} parent=5 // pred_region
        %s182 = ssub.s32 %s16, 1
        // Predicated region
        $region33: #{tpu_custom_call.1} parent=31 // pred_check
          %p183 = pneg %p37
        $region34: #{tpu_custom_call.1} parent=31 // pred_check_branch
          %185 = sbr.rel (%p183) target = $region36
        $region35: #{tpu_custom_call.1} parent=31 // pred_region
          %187 = dma.done [#allocation3], 384
        $region36: #{tpu_custom_call.1} parent=31 // pred_fallthru
          _
        %s188 = sand.u32 %s21, 1
        %s189 = scalar_lea.sflag [#allocation6], %s188
        %s190 = sand.u32 %s50, 1
        %s191 = smul.addr %s190, 4
        %s192 = scalar_lea.vmem [#allocation5], %s191
        // Predicated region
        $region37: #{tpu_custom_call.1} parent=31 // pred_check
          %p193 = pneg %p63
        $region38: #{tpu_custom_call.1} parent=31 // pred_check_branch
          %195 = sbr.rel (%p193) target = $region40
        $region39: #{tpu_custom_call.1} parent=31 // pred_region
          %197 = dma.done %s189, 64
        $region40: #{tpu_custom_call.1} parent=31 // pred_fallthru
          _
        // Predicated region
        $region41: #{tpu_custom_call.1} parent=31 // pred_check
          %p198 = pneg %p84
        $region42: #{tpu_custom_call.1} parent=31 // pred_check_branch
          %200 = sbr.rel (%p198) target = $region44
        $region43: #{tpu_custom_call.1} parent=31 // pred_region
          %202 = dma.done [#allocation6], 128
        $region44: #{tpu_custom_call.1} parent=31 // pred_fallthru
          _
        %p203 = pneg %p37
        %p204 = pneg %p34
        %s205 = sand.u32 %s21, 1
        %s206 = scalar_lea.sflag [#allocation6], %s205
        %s207 = sand.u32 %s50, 1
        %s208 = smul.addr %s207, 4
        %s209 = scalar_lea.vmem [#allocation5], %s208
        %p210 = pneg %p63
        %p211 = pneg %p60
        %p212 = pneg %p84
        %p213 = pneg %p81
        %p214 = pneg %p110
        %p215 = pneg %p107
        %s216 = sand.u32 %s97, 1
        %s217 = scalar_lea.sflag [#allocation4], %s216
        %s218 = sand.u32 %s97, 1
        %s219 = smul.addr %s218, 24
        %s220 = scalar_lea.vmem [#allocation8], %s219
        %v222 = vld [vmem:[%s192] sm:$0xf]
        %v223 = vld [vmem:[#allocation7] sm:$0xf]
        %v224 = vld [vmem:[#allocation7 + $0x4] sm:$0xf]
        %v225 = vld [vmem:[#allocation2] sm:$0xf]
        %v226 = vld [vmem:[#allocation2 + $0x4] sm:$0x3]
        %v229 = vunpack.c.l.b16 %v225
        %v230 = vunpack.c.l.b16 %v226
        %v231 = vpack.c.b16 %v230, %v229
        %vm232 = vcmask 97280
        %v234 = vsel %vm232, %v222, 0
        %vm236 = vcmask 1045504
        %v238 = vsel %vm236, %v231, 0
        %240 = vmatpush.bf16.msra.mxu0 0
        %241 = vmatpush.bf16.msra.mxu0 0
        %242 = vmatpush.bf16.msra.mxu0 0
        %243 = vmatpush.bf16.msra.mxu0 0
        %244 = vmatpush.bf16.msra.mxu0 0
        %245 = vmatpush.bf16.msra.mxu0 0
        %246 = vmatpush.bf16.msra.mxu0 0
        %247 = vmatpush.bf16.msra.mxu0 %v238
        %248 = vmatmul.bf16.gmra.mxu0 %v234
        %v249 = vpop.f32.mrf.mxu0
        %v250 = vadd.f32 0.0, %v249
        %v251 = vpop.f32.mrf.mxu0
        %252 = vdwg.mxu0
        %v253 = vpack.c.bf16 %v250, %v250
        %v256 = vunpack.c.l.b16 %v223
        %v257 = vunpack.c.l.b16 %v224
        %v258 = vpack.c.b16 %v257, %v256
        %vm260 = vcmask 130048
        %v262 = vsel %vm260, %v253, 0
        %264 = vmatpush.bf16.msra.mxu0 0
        %265 = vmatpush.bf16.msra.mxu0 0
        %266 = vmatpush.bf16.msra.mxu0 0
        %267 = vmatpush.bf16.msra.mxu0 0
        %268 = vmatpush.bf16.msra.mxu0 0
        %269 = vmatpush.bf16.msra.mxu0 0
        %270 = vmatpush.bf16.msra.mxu0 0
        %271 = vmatpush.bf16.msra.mxu0 %v258
        %272 = vmatmul.bf16.gmra.mxu0 %v262
        %v273 = vpop.f32.mrf.mxu0
        %v274 = vadd.f32 0.0, %v273
        %v275 = vpop.f32.mrf.mxu0
        %276 = vdwg.mxu0
        %277 = vst.msk [vmem:[%s220] sm:$0xff] %vm260, %v274
        %s278 = scalar_lea.vmem [#allocation2], 8
        %v279 = vld [vmem:[%s278] sm:$0xf]
        %v280 = vld [vmem:[%s278 + $0x4] sm:$0x3]
        %v283 = vunpack.c.l.b16 %v279
        %v284 = vunpack.c.l.b16 %v280
        %v285 = vpack.c.b16 %v284, %v283
        %v287 = vsel %vm236, %v285, 0
        %289 = vmatpush.bf16.msra.mxu0 0
        %290 = vmatpush.bf16.msra.mxu0 0
        %291 = vmatpush.bf16.msra.mxu0 0
        %292 = vmatpush.bf16.msra.mxu0 0
        %293 = vmatpush.bf16.msra.mxu0 0
        %294 = vmatpush.bf16.msra.mxu0 0
        %295 = vmatpush.bf16.msra.mxu0 0
        %296 = vmatpush.bf16.msra.mxu0 %v287
        %297 = vmatmul.bf16.gmra.mxu0 %v234
        %v298 = vpop.f32.mrf.mxu0
        %v299 = vadd.f32 0.0, %v298
        %v300 = vpop.f32.mrf.mxu0
        %301 = vdwg.mxu0
        %v302 = vpack.c.bf16 %v299, %v299
        %v304 = vsel %vm260, %v302, 0
        %306 = vmatpush.bf16.msra.mxu0 0
        %307 = vmatpush.bf16.msra.mxu0 0
        %308 = vmatpush.bf16.msra.mxu0 0
        %309 = vmatpush.bf16.msra.mxu0 0
        %310 = vmatpush.bf16.msra.mxu0 0
        %311 = vmatpush.bf16.msra.mxu0 0
        %312 = vmatpush.bf16.msra.mxu0 0
        %313 = vmatpush.bf16.msra.mxu0 %v258
        %314 = vmatmul.bf16.gmra.mxu0 %v304
        %v315 = vpop.f32.mrf.mxu0
        %v316 = vadd.f32 0.0, %v315
        %v317 = vpop.f32.mrf.mxu0
        %318 = vdwg.mxu0
        %s319 = scalar_lea.vmem %s220, 8 [#allocation8]
        %320 = vst.msk [vmem:[%s319] sm:$0xff] %vm260, %v316
        %s321 = scalar_lea.vmem [#allocation2], 16
        %v322 = vld [vmem:[%s321] sm:$0xf]
        %v323 = vld [vmem:[%s321 + $0x4] sm:$0x3]
        %v326 = vunpack.c.l.b16 %v322
        %v327 = vunpack.c.l.b16 %v323
        %v328 = vpack.c.b16 %v327, %v326
        %v330 = vsel %vm236, %v328, 0
        %332 = vmatpush.bf16.msra.mxu0 0
        %333 = vmatpush.bf16.msra.mxu0 0
        %334 = vmatpush.bf16.msra.mxu0 0
        %335 = vmatpush.bf16.msra.mxu0 0
        %336 = vmatpush.bf16.msra.mxu0 0
        %337 = vmatpush.bf16.msra.mxu0 0
        %338 = vmatpush.bf16.msra.mxu0 0
        %339 = vmatpush.bf16.msra.mxu0 %v330
        %340 = vmatmul.bf16.gmra.mxu0 %v234
        %v341 = vpop.f32.mrf.mxu0
        %v342 = vadd.f32 0.0, %v341
        %v343 = vpop.f32.mrf.mxu0
        %344 = vdwg.mxu0
        %v345 = vpack.c.bf16 %v342, %v342
        %v347 = vsel %vm260, %v345, 0
        %349 = vmatpush.bf16.msra.mxu0 0
        %350 = vmatpush.bf16.msra.mxu0 0
        %351 = vmatpush.bf16.msra.mxu0 0
        %352 = vmatpush.bf16.msra.mxu0 0
        %353 = vmatpush.bf16.msra.mxu0 0
        %354 = vmatpush.bf16.msra.mxu0 0
        %355 = vmatpush.bf16.msra.mxu0 0
        %356 = vmatpush.bf16.msra.mxu0 %v258
        %357 = vmatmul.bf16.gmra.mxu0 %v347
        %v358 = vpop.f32.mrf.mxu0
        %v359 = vadd.f32 0.0, %v358
        %v360 = vpop.f32.mrf.mxu0
        %361 = vdwg.mxu0
        %s362 = scalar_lea.vmem %s220, 16 [#allocation8]
        %363 = vst.msk [vmem:[%s362] sm:$0xff] %vm260, %v359
        %s364 = sand.u32 %s97, 1
        %s365 = scalar_lea.sflag [#allocation4], %s364
        %s366 = sand.u32 %s97, 1
        %s367 = smul.addr %s366, 24
        %s368 = scalar_lea.vmem [#allocation8], %s367
        // Predicated region
        $region45: #{tpu_custom_call.1} parent=31 // pred_check
          %p369 = pneg %p107
        $region46: #{tpu_custom_call.1} parent=31 // pred_check_branch
          %371 = sbr.rel (%p369) target = $region48
        $region47: #{tpu_custom_call.1} parent=31 // pred_region
          %373 = vsyncadd %s365, 0
          %s374 = smul.addr %s21, 8
          %s375 = scalar_lea.hbm %s3, %s374
          %s376 = sshll.u32 %s368, 4
          %s377 = int_to_ptr.vmem [resolvable:$true] %s376
          %s378 = sshll.u32 %s375, 4
          %s379 = int_to_ptr.hbm [resolvable:$true] %s378
          %384 = dma.vmem_to_hbm [thread:$0]  %s377, 384, %s379, %s365, 128, 256, 8
        $region48: #{tpu_custom_call.1} parent=31 // pred_fallthru
          _
      $region32: #{tpu_custom_call.1} parent=5 // pred_fallthru
        _
      %p385 = scmp.le.s32.totalorder 2, %s16
      // Predicated region
      $region49: #{tpu_custom_call.1} parent=5 // pred_check
        %p386 = pneg %p385
      $region50: #{tpu_custom_call.1} parent=5 // pred_check_branch
        %388 = sbr.rel (%p386) target = $region52
      $region51: #{tpu_custom_call.1} parent=5 // pred_region
        %s389 = ssub.s32 %s16, 2
        // Predicated region
        $region53: #{tpu_custom_call.1} parent=51 // pred_check
          %p390 = pneg %p113
        $region54: #{tpu_custom_call.1} parent=51 // pred_check_branch
          %392 = sbr.rel (%p390) target = $region56
        $region55: #{tpu_custom_call.1} parent=51 // pred_region
          %s393 = sand.u32 %s98, 1
          %s394 = scalar_lea.sflag [#allocation4], %s393
          %s395 = sand.u32 %s98, 1
          %s396 = smul.addr %s395, 24
          %s397 = scalar_lea.vmem [#allocation8], %s396
          %399 = dma.done %s394, 384
        $region56: #{tpu_custom_call.1} parent=51 // pred_fallthru
          _
      $region52: #{tpu_custom_call.1} parent=5 // pred_fallthru
        _
    $region6: #{tpu_custom_call.1} parent=1 // loop_footer
      %s20 = sadd.s32 1, %s16
    $region7: #{tpu_custom_call.1} parent=1 // loop_footer_branch
      %15 = sbr.rel target = $region3
    $region8: #{tpu_custom_call.1} parent=1 // loop_exit
      _
    %400 = vsyncpa [#allocation3], 1
    %s401 = scalar_lea.sflag [#allocation3], 1
    %402 = vsyncpa %s401, 1
    %403 = vsyncpa [#allocation6], 1
    %s404 = scalar_lea.sflag [#allocation6], 1
    %405 = vsyncpa %s404, 1
    %406 = vsyncpa [#allocation4], 1
    %s407 = scalar_lea.sflag [#allocation4], 1
    %408 = vsyncpa %s407, 1

</llo_original>
